<compile_context>
chip_gen: v7x
topology: tpu7x:2x2x1
jax: 0.10.0
libtpu: 0.0.40
codegen_flags: <defaults>
</compile_context>

<pallas_src>
import jax
import jax.numpy as jnp
from jax.experimental import pallas as pl
from jax.experimental.pallas import tpu as pltpu


def _round_up(n, m):
    return ((n + m - 1) // m) * m


def _fraud_mlp_kernel(x_ref, w1_ref, b1_ref, w2_ref, b2_ref, w3_ref, b3_ref, o_ref):
    # x tile: (TB, D) bf16. Weights are VMEM-resident (constant index_maps).
    x = x_ref[...]

    # Layer 1: (TB, D) @ (D, H1) on the MXU, f32 accumulate.
    h1 = jnp.dot(x, w1_ref[...], preferred_element_type=jnp.float32) + b1_ref[...]
    h1 = jnp.maximum(h1, 0.0)                                   # ReLU  (VPU)
    # Dropout(p=0.3) -> identity in eval mode.

    # Layer 2: feed MXU at bf16 rate, f32 accumulate.
    h2 = jnp.dot(h1.astype(jnp.bfloat16), w2_ref[...],
                 preferred_element_type=jnp.float32) + b2_ref[...]
    h2 = jnp.maximum(h2, 0.0)                                   # ReLU  (VPU)

    # Layer 3 (H2 -> 1): N=1 would use 1/256 of the MXU; do VPU mul + row reduce.
    logits = jnp.sum(h2 * w3_ref[...], axis=-1, keepdims=True) + b3_ref[...]
    o_ref[...] = jax.nn.sigmoid(logits).astype(o_ref.dtype)     # sigmoid (EUP)


def fraud_net_forward(x, params, *, block_b=1024):
    """x: (B, D) float32. Returns (B, 1) float32 sigmoid probabilities."""
    w1, b1, w2, b2, w3, b3 = params
    B, D = x.shape
    H1 = w1.shape[1]
    H2 = w2.shape[1]

    # Batch tile: large enough to amortize the ~0.35us/step grid overhead, small
    # enough that double-buffered x tiles + f32 activations + resident weights sit
    # comfortably under the scoped VMEM limit on every chip (v5e 16MiB .. v7x 64MiB).
    tb = min(block_b, max(8, _round_up(B, 8)))
    tb = _round_up(tb, 8)
    b_pad = _round_up(B, tb)
    if b_pad != B:
        x = jnp.pad(x, ((0, b_pad - B), (0, 0)))

    # bf16 feed to the MXU; accumulation stays f32 inside the kernel.
    x_bf = x.astype(jnp.bfloat16)
    w1_bf = w1.astype(jnp.bfloat16)
    w2_bf = w2.astype(jnp.bfloat16)

    grid = (b_pad // tb,)
    out = pl.pallas_call(
        _fraud_mlp_kernel,
        out_shape=jax.ShapeDtypeStruct((b_pad, 1), jnp.float32),
        grid=grid,
        in_specs=[
            pl.BlockSpec((tb, D), lambda i: (i, 0)),    # x: tiled over batch
            pl.BlockSpec((D, H1), lambda i: (0, 0)),    # W1: resident across grid
            pl.BlockSpec((1, H1), lambda i: (0, 0)),    # b1
            pl.BlockSpec((H1, H2), lambda i: (0, 0)),   # W2
            pl.BlockSpec((1, H2), lambda i: (0, 0)),    # b2
            pl.BlockSpec((1, H2), lambda i: (0, 0)),    # W3 row (f32, VPU path)
            pl.BlockSpec((1, 1), lambda i: (0, 0)),     # b3
        ],
        out_specs=pl.BlockSpec((tb, 1), lambda i: (i, 0)),
        compiler_params=pltpu.CompilerParams(
            dimension_semantics=("parallel",),
        ),
    )(x_bf, w1_bf, b1, w2_bf, b2, w3, b3)
    return out[:B]


def fraud_net_reference(x, params):
    """Pure-JAX reference (f32) for correctness checking."""
    w1, b1, w2, b2, w3, b3 = params
    h1 = jnp.maximum(x @ w1 + b1, 0.0)
    h2 = jnp.maximum(h1 @ w2 + b2, 0.0)
    return jax.nn.sigmoid(h2 @ w3.T + b3)


def init_params(key, input_dim, hidden_dim1=128, hidden_dim2=64):
    """Deterministic init mimicking PyTorch nn.Linear (uniform +-1/sqrt(fan_in)).
    W1/W2 stored as (in, out); W3 stored as the PyTorch (1, hidden_dim2) row;
    biases as (1, out) for TPU-friendly broadcasting."""
    ks = jax.random.split(key, 6)

    def linear(kw, kb, fan_in, fan_out):
        bound = 1.0 / jnp.sqrt(fan_in)
        w = jax.random.uniform(kw, (fan_in, fan_out), jnp.float32, -bound, bound)
        b = jax.random.uniform(kb, (1, fan_out), jnp.float32, -bound, bound)
        return w, b

    w1, b1 = linear(ks[0], ks[1], input_dim, hidden_dim1)
    w2, b2 = linear(ks[2], ks[3], hidden_dim1, hidden_dim2)
    w3t, b3 = linear(ks[4], ks[5], hidden_dim2, 1)
    w3 = w3t.T  # (1, hidden_dim2) row, used on the VPU path in-kernel
    return (w1, b1, w2, b2, w3, b3)


if __name__ == "__main__":
    key = jax.random.PRNGKey(0)
    k_param, k_x1, k_x2 = jax.random.split(key, 3)

    batch, input_dim = 8, 32
    params = init_params(k_param, input_dim)

    # Small single-tile case.
    x1 = jax.random.normal(k_x1, (batch, input_dim), jnp.float32)
    out1 = jax.block_until_ready(fraud_net_forward(x1, params))
    ref1 = fraud_net_reference(x1, params)
    assert out1.shape == (batch, 1)
    assert bool(jnp.all((out1 >= 0.0) & (out1 <= 1.0)))
    assert bool(jnp.allclose(out1, ref1, atol=3e-2)), "mismatch vs reference (single tile)"

    # Multi-tile case with padding (exercises the grid + last-block slice path).
    batch2 = 200
    x2 = jax.random.normal(k_x2, (batch2, input_dim), jnp.float32)
    out2 = jax.block_until_ready(fraud_net_forward(x2, params, block_b=64))
    ref2 = fraud_net_reference(x2, params)
    assert out2.shape == (batch2, 1)
    assert bool(jnp.all((out2 >= 0.0) & (out2 <= 1.0)))
    assert bool(jnp.allclose(out2, ref2, atol=3e-2)), "mismatch vs reference (tiled)"

    print("KERNEL_OK")
</pallas_src>

<mosaic_0001>
module attributes {stable_mosaic.version = 11 : i64} {
  func.func @_fraud_mlp_kernel(%arg0: i32, %arg1: memref<8x32xbf16, #tpu.memory_space<vmem>>, %arg2: memref<32x128xbf16, #tpu.memory_space<vmem>>, %arg3: memref<1x128xf32, #tpu.memory_space<vmem>>, %arg4: memref<128x64xbf16, #tpu.memory_space<vmem>>, %arg5: memref<1x64xf32, #tpu.memory_space<vmem>>, %arg6: memref<1x64xf32, #tpu.memory_space<vmem>>, %arg7: memref<1x1xf32, #tpu.memory_space<vmem>>, %arg8: memref<8x1xf32, #tpu.memory_space<vmem>>) attributes {dimension_semantics = [#tpu.dimension_semantics<parallel>], iteration_bounds = array<i64: 1>, scalar_prefetch = 0 : i64, scratch_operands = 0 : i64, tpu.core_type = #tpu.core_type<tc>, window_params = [{transform_indices = @transform_0, window_bounds = array<i64: 8, 32>}, {pipeline_mode = #tpu.pipeline_mode<synchronous>, transform_indices = @transform_1, window_bounds = array<i64: 32, 128>}, {pipeline_mode = #tpu.pipeline_mode<synchronous>, transform_indices = @transform_2, window_bounds = array<i64: 1, 128>}, {pipeline_mode = #tpu.pipeline_mode<synchronous>, transform_indices = @transform_3, window_bounds = array<i64: 128, 64>}, {pipeline_mode = #tpu.pipeline_mode<synchronous>, transform_indices = @transform_4, window_bounds = array<i64: 1, 64>}, {pipeline_mode = #tpu.pipeline_mode<synchronous>, transform_indices = @transform_5, window_bounds = array<i64: 1, 64>}, {pipeline_mode = #tpu.pipeline_mode<synchronous>, transform_indices = @transform_6, window_bounds = array<i64: 1, 1>}, {transform_indices = @transform_7, window_bounds = array<i64: 8, 1>}]} {
    %c0 = arith.constant 0 : index
    %c0_0 = arith.constant 0 : index
    %0 = vector.load %arg1[%c0, %c0_0] : memref<8x32xbf16, #tpu.memory_space<vmem>>, vector<8x32xbf16>
    %c0_1 = arith.constant 0 : index
    %c0_2 = arith.constant 0 : index
    %1 = vector.load %arg2[%c0_1, %c0_2] : memref<32x128xbf16, #tpu.memory_space<vmem>>, vector<32x128xbf16>
    %cst = arith.constant dense<0.000000e+00> : vector<8x128xf32>
    %2 = tpu.matmul %0, %1, %cst {dimension_numbers = #tpu.dot_dimension_numbers<[1], [0], [0], [1], [0, 0, 1, 1], [], []>} : vector<8x32xbf16>, vector<32x128xbf16>, vector<8x128xf32> -> vector<8x128xf32>
    %c0_3 = arith.constant 0 : index
    %c0_4 = arith.constant 0 : index
    %3 = vector.load %arg3[%c0_3, %c0_4] : memref<1x128xf32, #tpu.memory_space<vmem>>, vector<1x128xf32>
    %4 = vector.broadcast %3 : vector<1x128xf32> to vector<8x128xf32>
    %5 = arith.addf %2, %4 : vector<8x128xf32>
    %cst_5 = arith.constant 0.000000e+00 : f32
    %6 = vector.broadcast %cst_5 : f32 to vector<8x128xf32>
    %7 = arith.maximumf %5, %6 : vector<8x128xf32>
    %8 = arith.truncf %7 : vector<8x128xf32> to vector<8x128xbf16>
    %c0_6 = arith.constant 0 : index
    %c0_7 = arith.constant 0 : index
    %9 = vector.load %arg4[%c0_6, %c0_7] : memref<128x64xbf16, #tpu.memory_space<vmem>>, vector<128x64xbf16>
    %cst_8 = arith.constant dense<0.000000e+00> : vector<8x64xf32>
    %10 = tpu.matmul %8, %9, %cst_8 {dimension_numbers = #tpu.dot_dimension_numbers<[1], [0], [0], [1], [0, 0, 1, 1], [], []>} : vector<8x128xbf16>, vector<128x64xbf16>, vector<8x64xf32> -> vector<8x64xf32>
    %c0_9 = arith.constant 0 : index
    %c0_10 = arith.constant 0 : index
    %11 = vector.load %arg5[%c0_9, %c0_10] : memref<1x64xf32, #tpu.memory_space<vmem>>, vector<1x64xf32>
    %12 = vector.broadcast %11 : vector<1x64xf32> to vector<8x64xf32>
    %13 = arith.addf %10, %12 : vector<8x64xf32>
    %cst_11 = arith.constant 0.000000e+00 : f32
    %14 = vector.broadcast %cst_11 : f32 to vector<8x64xf32>
    %15 = arith.maximumf %13, %14 : vector<8x64xf32>
    %c0_12 = arith.constant 0 : index
    %c0_13 = arith.constant 0 : index
    %16 = vector.load %arg6[%c0_12, %c0_13] : memref<1x64xf32, #tpu.memory_space<vmem>>, vector<1x64xf32>
    %17 = vector.broadcast %16 : vector<1x64xf32> to vector<8x64xf32>
    %18 = arith.mulf %15, %17 : vector<8x64xf32>
    %cst_14 = arith.constant dense<0.000000e+00> : vector<8xf32>
    %19 = vector.multi_reduction <add>, %18, %cst_14 [1] : vector<8x64xf32> to vector<8xf32>
    %20 = vector.shape_cast %19 : vector<8xf32> to vector<8x1xf32>
    %c0_15 = arith.constant 0 : index
    %c0_16 = arith.constant 0 : index
    %21 = vector.load %arg7[%c0_15, %c0_16] : memref<1x1xf32, #tpu.memory_space<vmem>>, vector<1x1xf32>
    %22 = vector.broadcast %21 : vector<1x1xf32> to vector<8x1xf32>
    %23 = arith.addf %20, %22 : vector<8x1xf32>
    %24 = arith.negf %23 : vector<8x1xf32>
    %25 = math.exp %24 : vector<8x1xf32>
    %cst_17 = arith.constant 1.000000e+00 : f32
    %26 = vector.broadcast %cst_17 : f32 to vector<8x1xf32>
    %27 = arith.addf %26, %25 : vector<8x1xf32>
    %28 = arith.divf %26, %27 : vector<8x1xf32>
    %c0_18 = arith.constant 0 : index
    %c0_19 = arith.constant 0 : index
    %29 = vector.load %arg8[%c0_18, %c0_19] : memref<8x1xf32, #tpu.memory_space<vmem>>, vector<8x1xf32>
    tpu.vector_store %arg8[%c0_18, %c0_19], %28 {strides = array<i32>} : memref<8x1xf32, #tpu.memory_space<vmem>>, vector<8x1xf32>,
    return
  }
  func.func @transform_0(%arg0: i32) -> (i32, i32) {
    %c0_i32 = arith.constant 0 : i32
    %c0_i32_0 = arith.constant 0 : i32
    return %arg0, %c0_i32 : i32, i32
  }
  func.func @transform_1(%arg0: i32) -> (i32, i32) {
    %c0_i32 = arith.constant 0 : i32
    %c0_i32_0 = arith.constant 0 : i32
    %c0_i32_1 = arith.constant 0 : i32
    return %c0_i32, %c0_i32_0 : i32, i32
  }
  func.func @transform_2(%arg0: i32) -> (i32, i32) {
    %c0_i32 = arith.constant 0 : i32
    %c0_i32_0 = arith.constant 0 : i32
    %c0_i32_1 = arith.constant 0 : i32
    return %c0_i32, %c0_i32_0 : i32, i32
  }
  func.func @transform_3(%arg0: i32) -> (i32, i32) {
    %c0_i32 = arith.constant 0 : i32
    %c0_i32_0 = arith.constant 0 : i32
    %c0_i32_1 = arith.constant 0 : i32
    return %c0_i32, %c0_i32_0 : i32, i32
  }
  func.func @transform_4(%arg0: i32) -> (i32, i32) {
    %c0_i32 = arith.constant 0 : i32
    %c0_i32_0 = arith.constant 0 : i32
    %c0_i32_1 = arith.constant 0 : i32
    return %c0_i32, %c0_i32_0 : i32, i32
  }
  func.func @transform_5(%arg0: i32) -> (i32, i32) {
    %c0_i32 = arith.constant 0 : i32
    %c0_i32_0 = arith.constant 0 : i32
    %c0_i32_1 = arith.constant 0 : i32
    return %c0_i32, %c0_i32_0 : i32, i32
  }
  func.func @transform_6(%arg0: i32) -> (i32, i32) {
    %c0_i32 = arith.constant 0 : i32
    %c0_i32_0 = arith.constant 0 : i32
    %c0_i32_1 = arith.constant 0 : i32
    return %c0_i32, %c0_i32_0 : i32, i32
  }
  func.func @transform_7(%arg0: i32) -> (i32, i32) {
    %c0_i32 = arith.constant 0 : i32
    %c0_i32_0 = arith.constant 0 : i32
    return %arg0, %c0_i32 : i32, i32
  }
}

</mosaic_0001>

<llo_original>
// kernel: tpu_custom_call.1
$region0: #{tpu_custom_call.1}
  #allocation0 [shape = 'u32[]', space=smem, size = 0x4, offset = 0x4, fixed_abs, tag = 'smem constant byte address 0x4 - core index']
  #allocation1 [shape = 'u32[144,128]{1,0:T(1,128)}', space=vmem, size = 0x12000, scoped, tag = 'internal scratch']
  #allocation2 [shape = 'f32[1,1]{1,0:T(1,128)S(1)}', space=vmem, size = 0x200, scoped, tag = 'scoped memory for tpu_custom_call.1']
  %s0 = inlined_call_operand.vmem [shape: bf16[8,32], index: 0, kind: input, shape index: {}]
  %s1 = inlined_call_operand.vmem [shape: bf16[32,128], index: 1, kind: input, shape index: {}]
  %s2 = inlined_call_operand.vmem [shape: f32[1,128], index: 2, kind: input, shape index: {}]
  %s3 = inlined_call_operand.vmem [shape: bf16[128,64], index: 3, kind: input, shape index: {}]
  %s4 = inlined_call_operand.vmem [shape: f32[1,64], index: 4, kind: input, shape index: {}]
  %s5 = inlined_call_operand.vmem [shape: f32[1,64], index: 5, kind: input, shape index: {}]
  %s6 = inlined_call_operand.<no memory space> [shape: f32[1,1], index: 6, kind: input, shape index: {}]
  %s7 = inlined_call_operand.vmem [shape: f32[8,1], index: 7, kind: output, shape index: {}]
  %s8 = sld [smem:[#allocation0]]
  $region38: #{tpu_custom_call.1} parent=0
    _
  %s10 = ssub.s32 1, %s8
  %s11 = scalar_select 0, %s10, %s8
  %v12 = vstv %s6
  %13 = vst [vmem:[#allocation2] sm:$0x1] %v12
  // Predicated region
  $region2: #{tpu_custom_call.1} parent=0 // pred_check
    _
  $region3: #{tpu_custom_call.1} parent=0 // pred_check_branch
    %15 = sbr.rel (0) target = $region5
  $region4: #{tpu_custom_call.1} parent=0 // pred_region
    _
  $region5: #{tpu_custom_call.1} parent=0 // pred_fallthru
    _
  // Predicated region
  $region6: #{tpu_custom_call.1} parent=0 // pred_check
    _
  $region7: #{tpu_custom_call.1} parent=0 // pred_check_branch
    %17 = sbr.rel (0) target = $region9
  $region8: #{tpu_custom_call.1} parent=0 // pred_region
    _
  $region9: #{tpu_custom_call.1} parent=0 // pred_fallthru
    _
  // Predicated region
  $region10: #{tpu_custom_call.1} parent=0 // pred_check
    _
  $region11: #{tpu_custom_call.1} parent=0 // pred_check_branch
    %19 = sbr.rel (0) target = $region13
  $region12: #{tpu_custom_call.1} parent=0 // pred_region
    _
  $region13: #{tpu_custom_call.1} parent=0 // pred_fallthru
    _
  // Predicated region
  $region14: #{tpu_custom_call.1} parent=0 // pred_check
    _
  $region15: #{tpu_custom_call.1} parent=0 // pred_check_branch
    %21 = sbr.rel (0) target = $region17
  $region16: #{tpu_custom_call.1} parent=0 // pred_region
    _
  $region17: #{tpu_custom_call.1} parent=0 // pred_fallthru
    _
  // Predicated region
  $region18: #{tpu_custom_call.1} parent=0 // pred_check
    _
  $region19: #{tpu_custom_call.1} parent=0 // pred_check_branch
    %23 = sbr.rel (0) target = $region21
  $region20: #{tpu_custom_call.1} parent=0 // pred_region
    _
  $region21: #{tpu_custom_call.1} parent=0 // pred_fallthru
    _
  // Predicated region
  $region22: #{tpu_custom_call.1} parent=0 // pred_check
    _
  $region23: #{tpu_custom_call.1} parent=0 // pred_check_branch
    %25 = sbr.rel (0) target = $region25
  $region24: #{tpu_custom_call.1} parent=0 // pred_region
    _
  $region25: #{tpu_custom_call.1} parent=0 // pred_fallthru
    _
  // Predicated region
  $region26: #{tpu_custom_call.1} parent=0 // pred_check
    _
  $region27: #{tpu_custom_call.1} parent=0 // pred_check_branch
    %27 = sbr.rel (0) target = $region29
  $region28: #{tpu_custom_call.1} parent=0 // pred_region
    _
  $region29: #{tpu_custom_call.1} parent=0 // pred_fallthru
    _
  %v29 = vld [vmem:[%s0] sm:$0xf]
  %v30 = vld [vmem:[%s1] sm:$0xf]
  %v31 = vld [vmem:[%s1 + $0x4] sm:$0xf]
  %v32 = vld [vmem:[%s1 + $0x8] sm:$0xf]
  %v33 = vld [vmem:[%s1 + $0xc] sm:$0xf]
  %v34 = vld [vmem:[%s2] sm:$0x1]
  %v36 = vlaneseq
  %v37 = vshrl.u32 %v36, 7
  %v38 = vsub.s32 0, %v37
  %v39 = vrot.slane %v34, %v38
  %v45 = vunpack.c.l.b16 %v30
  %v46 = vunpack.c.l.b16 %v31
  %v47 = vunpack.c.l.b16 %v32
  %v48 = vunpack.c.l.b16 %v33
  %v49 = vpack.c.b16 %v46, %v45
  %v50 = vpack.c.b16 %v48, %v47
  %vm53 = vcmask 261120
  %v55 = vsel %vm53, %v29, 0
  %57 = vmatprep.subr.bf16.mxu0 0
  %58 = vmatpush1.bf16.msra.mxu0 %v49
  %59 = vmatprep.subr.bf16.mxu0 0
  %60 = vmatpush1.bf16.msra.mxu0 %v50
  %61 = vmatprep.subr.bf16.mxu0 0
  %62 = vmatpush1.bf16.msra.mxu0 0
  %63 = vmatprep.subr.bf16.mxu0 0
  %64 = vmatpush1.bf16.msra.mxu0 0
  %65 = vmatprep.subr.bf16.mxu0 0
  %66 = vmatpush1.bf16.msra.mxu0 0
  %67 = vmatprep.subr.bf16.mxu0 0
  %68 = vmatpush1.bf16.msra.mxu0 0
  %69 = vmatprep.subr.bf16.mxu0 0
  %70 = vmatpush1.bf16.msra.mxu0 0
  %71 = vmatprep.subr.bf16.mxu0 0
  %72 = vmatpush1.bf16.msra.mxu0 0
  %73 = vmatprep.subr.bf16.mxu0 0
  %74 = vmatpush1.bf16.msra.mxu0 0
  %75 = vmatprep.subr.bf16.mxu0 0
  %76 = vmatpush1.bf16.msra.mxu0 0
  %77 = vmatprep.subr.bf16.mxu0 0
  %78 = vmatpush1.bf16.msra.mxu0 0
  %79 = vmatprep.subr.bf16.mxu0 0
  %80 = vmatpush1.bf16.msra.mxu0 0
  %81 = vmatprep.subr.bf16.mxu0 0
  %82 = vmatpush1.bf16.msra.mxu0 0
  %83 = vmatprep.subr.bf16.mxu0 0
  %84 = vmatpush1.bf16.msra.mxu0 0
  %85 = vmatprep.subr.bf16.mxu0 0
  %86 = vmatpush1.bf16.msra.mxu0 0
  %87 = vmatprep.subr.bf16.mxu0 0
  %88 = vmatpush1.bf16.msra.mxu0 0
  %89 = vmatprep.mubr.bf16.mxu0 0
  %90 = vmatmul.mubr.bf16.gmra.mrb[0].mxu0 %v55
  %v91 = vpop.f32.mrb[0].mxu0
  %v92 = vadd.f32 %v39, %v91
  %v93 = vpop.f32.mrb[0].mxu0
  %v94 = vpop.f32.mrb[0].mxu0
  %v95 = vpop.f32.mrb[0].mxu0
  %96 = vdwg.mxu0
  %v97 = vmax.f32 %v92, 0.0
  %v98 = vpack.c.bf16 %v97, %v97
  %v99 = vld [vmem:[%s3] sm:$0xf]
  %v100 = vld [vmem:[%s3 + $0x4] sm:$0xf]
  %v101 = vld [vmem:[%s3 + $0x8] sm:$0xf]
  %v102 = vld [vmem:[%s3 + $0xc] sm:$0xf]
  %v103 = vld [vmem:[%s3 + $0x10] sm:$0xf]
  %v104 = vld [vmem:[%s3 + $0x14] sm:$0xf]
  %v105 = vld [vmem:[%s3 + $0x18] sm:$0xf]
  %v106 = vld [vmem:[%s3 + $0x1c] sm:$0xf]
  %v107 = vld [vmem:[%s3 + $0x20] sm:$0xf]
  %v108 = vld [vmem:[%s3 + $0x24] sm:$0xf]
  %v109 = vld [vmem:[%s3 + $0x28] sm:$0xf]
  %v110 = vld [vmem:[%s3 + $0x2c] sm:$0xf]
  %v111 = vld [vmem:[%s3 + $0x30] sm:$0xf]
  %v112 = vld [vmem:[%s3 + $0x34] sm:$0xf]
  %v113 = vld [vmem:[%s3 + $0x38] sm:$0xf]
  %v114 = vld [vmem:[%s3 + $0x3c] sm:$0xf]
  %v115 = vld [vmem:[%s4] sm:$0x1]
  %v117 = vlaneseq
  %v118 = vshrl.u32 %v117, 7
  %v119 = vsub.s32 0, %v118
  %v120 = vrot.slane %v115, %v119
  %v138 = vunpack.c.l.b16 %v99
  %v139 = vunpack.c.l.b16 %v100
  %v140 = vunpack.c.l.b16 %v101
  %v141 = vunpack.c.l.b16 %v102
  %v142 = vunpack.c.l.b16 %v103
  %v143 = vunpack.c.l.b16 %v104
  %v144 = vunpack.c.l.b16 %v105
  %v145 = vunpack.c.l.b16 %v106
  %v146 = vunpack.c.l.b16 %v107
  %v147 = vunpack.c.l.b16 %v108
  %v148 = vunpack.c.l.b16 %v109
  %v149 = vunpack.c.l.b16 %v110
  %v150 = vunpack.c.l.b16 %v111
  %v151 = vunpack.c.l.b16 %v112
  %v152 = vunpack.c.l.b16 %v113
  %v153 = vunpack.c.l.b16 %v114
  %v154 = vpack.c.b16 %v139, %v138
  %v155 = vpack.c.b16 %v141, %v140
  %v156 = vpack.c.b16 %v143, %v142
  %v157 = vpack.c.b16 %v145, %v144
  %v158 = vpack.c.b16 %v147, %v146
  %v159 = vpack.c.b16 %v149, %v148
  %v160 = vpack.c.b16 %v151, %v150
  %v161 = vpack.c.b16 %v153, %v152
  %170 = vmatprep.subr.bf16.mxu0 0
  %171 = vmatpush1.bf16.msra.mxu0 %v154
  %172 = vmatprep.subr.bf16.mxu0 0
  %173 = vmatpush1.bf16.msra.mxu0 %v155
  %174 = vmatprep.subr.bf16.mxu0 0
  %175 = vmatpush1.bf16.msra.mxu0 %v156
  %176 = vmatprep.subr.bf16.mxu0 0
  %177 = vmatpush1.bf16.msra.mxu0 %v157
  %178 = vmatprep.subr.bf16.mxu0 0
  %179 = vmatpush1.bf16.msra.mxu0 %v158
  %180 = vmatprep.subr.bf16.mxu0 0
  %181 = vmatpush1.bf16.msra.mxu0 %v159
  %182 = vmatprep.subr.bf16.mxu0 0
  %183 = vmatpush1.bf16.msra.mxu0 %v160
  %184 = vmatprep.subr.bf16.mxu0 0
  %185 = vmatpush1.bf16.msra.mxu0 %v161
  %186 = vmatprep.subr.bf16.mxu0 0
  %187 = vmatpush1.bf16.msra.mxu0 0
  %188 = vmatprep.subr.bf16.mxu0 0
  %189 = vmatpush1.bf16.msra.mxu0 0
  %190 = vmatprep.subr.bf16.mxu0 0
  %191 = vmatpush1.bf16.msra.mxu0 0
  %192 = vmatprep.subr.bf16.mxu0 0
  %193 = vmatpush1.bf16.msra.mxu0 0
  %194 = vmatprep.subr.bf16.mxu0 0
  %195 = vmatpush1.bf16.msra.mxu0 0
  %196 = vmatprep.subr.bf16.mxu0 0
  %197 = vmatpush1.bf16.msra.mxu0 0
  %198 = vmatprep.subr.bf16.mxu0 0
  %199 = vmatpush1.bf16.msra.mxu0 0
  %200 = vmatprep.subr.bf16.mxu0 0
  %201 = vmatpush1.bf16.msra.mxu0 0
  %202 = vmatprep.mubr.bf16.mxu0 0
  %203 = vmatmul.mubr.bf16.gmra.mrb[0].mxu0 %v98
  %v204 = vpop.f32.mrb[0].mxu0
  %v205 = vadd.f32 %v120, %v204
  %v206 = vpop.f32.mrb[0].mxu0
  %v207 = vpop.f32.mrb[0].mxu0
  %v208 = vpop.f32.mrb[0].mxu0
  %209 = vdwg.mxu0
  %v210 = vmax.f32 %v205, 0.0
  %v211 = vld [vmem:[%s5] sm:$0x1]
  %v213 = vlaneseq
  %v214 = vshrl.u32 %v213, 7
  %v215 = vsub.s32 0, %v214
  %v216 = vrot.slane %v211, %v215
  %v218 = vmul.f32 %v210, %v216
  %vm219 = vcmask 523264
  %v220 = vsel %vm219, %v218, 0.0
  %221 = vadd.xlane.f32.xlu0 %v220
  %v222 = vpop.xlane.xlu0 %221
  %v223 = vld [vmem:[#allocation2] sm:$0x1]
  %v225 = vlaneseq
  %v226 = vshrl.u32 %v225, 7
  %v227 = vsub.s32 0, %v226
  %v228 = vrot.slane %v223, %v227
  %v230 = vadd.f32 %v222, %v228
  %v231 = vxor.u32 %v230, 2147483648
  %v232 = vmul.f32 %v231, 1.442695
  %v233 = vpow.pop %v232
  %v234 = vadd.f32 %v233, 1.0
  %v235 = vrcp.pop %v234
  %v236 = vmul.f32 1.0, %v235
  %vm237 = vcmask 7168
  %238 = vst.msk [vmem:[%s7] sm:$0xff] %vm237, %v236
  // Predicated region
  $region30: #{tpu_custom_call.1} parent=0 // pred_check
    _
  $region31: #{tpu_custom_call.1} parent=0 // pred_check_branch
    %240 = sbr.rel (0) target = $region33
  $region32: #{tpu_custom_call.1} parent=0 // pred_region
    _
  $region33: #{tpu_custom_call.1} parent=0 // pred_fallthru
    _
  // Predicated region
  $region34: #{tpu_custom_call.1} parent=0 // pred_check
    _
  $region35: #{tpu_custom_call.1} parent=0 // pred_check_branch
    %242 = sbr.rel (0) target = $region37
  $region36: #{tpu_custom_call.1} parent=0 // pred_region
    _
  $region37: #{tpu_custom_call.1} parent=0 // pred_fallthru
    _

</llo_original>
